<compile_context>
chip_gen: v7x
topology: tpu7x:2x2x1
jax: 0.10.0
libtpu: 0.0.40
codegen_flags: <defaults>
</compile_context>

<pallas_src>
import functools

import jax
import jax.numpy as jnp
from jax.experimental import pallas as pl
from jax.experimental.pallas import tpu as pltpu


def _round_up(x, m):
    return (x + m - 1) // m * m


def swiglu_kernel(x_ref, w12_ref, b12_ref, w3_ref, b3_ref, o_ref, acc_ref, *, th):
    h = pl.program_id(1)

    @pl.when(h == 0)
    def _():
        acc_ref[...] = jnp.zeros_like(acc_ref)

    # One wide matmul covers both branches: [gate | value] columns were
    # interleaved per hidden tile on the host side.  f32 MXU accumulation.
    h12 = jnp.dot(x_ref[...], w12_ref[...], preferred_element_type=jnp.float32)
    h12 = h12 + b12_ref[...]
    gate = h12[:, :th]
    val = h12[:, th:]
    act = gate * jax.nn.sigmoid(gate)            # SiLU / swish
    # dropout (inference) is identity; fuse the elementwise product and cast
    # back to the weight dtype so the W3 matmul runs at native MXU operand width.
    hidden = (act * val).astype(w3_ref.dtype)

    acc_ref[...] += jnp.dot(hidden, w3_ref[...], preferred_element_type=jnp.float32)

    @pl.when(h == pl.num_programs(1) - 1)
    def _():
        o_ref[...] = (acc_ref[...] + b3_ref[...]).astype(o_ref.dtype)


def swiglu_pallas(x, w1, b1, w2, b2, w3, b3, *, tm=256, th=512):
    """x: (..., input_dim); weights stored as (in, out); biases as (1, out)."""
    orig_shape = x.shape
    input_dim = orig_shape[-1]
    hidden_dim = w1.shape[1]
    output_dim = w3.shape[1]

    x2d = x.reshape(-1, input_dim)
    M = x2d.shape[0]

    # ---- tile sizes ------------------------------------------------------
    tm = _round_up(min(tm, _round_up(M, 8)), 8)   # big M tile; shrink for tiny M
    th = _round_up(min(th, hidden_dim), 64)       # 2*th is then lane-aligned (128)
    M_pad = _round_up(M, tm)
    K_pad = _round_up(input_dim, 128)             # lane-dense x loads
    H_pad = _round_up(hidden_dim, th)
    N_pad = _round_up(output_dim, 128)            # lane-dense output stores
    nh = H_pad // th

    # ---- host-side padding / weight fusion -------------------------------
    xp = x2d
    if M_pad != M or K_pad != input_dim:
        xp = jnp.pad(x2d, ((0, M_pad - M), (0, K_pad - input_dim)))

    def pad_w(a):                                  # pad (K, H) weight
        return jnp.pad(a, ((0, K_pad - input_dim), (0, H_pad - hidden_dim)))

    def pad_b(a):                                  # pad (1, H) bias
        return jnp.pad(a, ((0, 0), (0, H_pad - hidden_dim)))

    w1p, w2p = pad_w(w1), pad_w(w2)
    b1p, b2p = pad_b(b1), pad_b(b2)
    # Interleave per hidden tile: block h holds [W1[:, h*th:(h+1)*th] | W2[:, ...]].
    w12 = jnp.concatenate(
        [w1p.reshape(K_pad, nh, th), w2p.reshape(K_pad, nh, th)], axis=2
    ).reshape(K_pad, 2 * H_pad)
    b12 = jnp.concatenate(
        [b1p.reshape(1, nh, th), b2p.reshape(1, nh, th)], axis=2
    ).reshape(1, 2 * H_pad)
    w3p = jnp.pad(w3, ((0, H_pad - hidden_dim), (0, N_pad - output_dim)))
    b3p = jnp.pad(b3, ((0, 0), (0, N_pad - output_dim)))

    grid = (M_pad // tm, nh)

    out_pad = pl.pallas_call(
        functools.partial(swiglu_kernel, th=th),
        out_shape=jax.ShapeDtypeStruct((M_pad, N_pad), x.dtype),
        grid=grid,
        in_specs=[
            pl.BlockSpec((tm, K_pad), lambda i, h: (i, 0)),          # x tile
            pl.BlockSpec((K_pad, 2 * th), lambda i, h: (0, h)),      # fused W1|W2 tile
            pl.BlockSpec((1, 2 * th), lambda i, h: (0, h)),          # fused b1|b2 tile
            pl.BlockSpec((th, N_pad), lambda i, h: (h, 0)),          # W3 tile
            pl.BlockSpec((1, N_pad), lambda i, h: (0, 0)),           # b3
        ],
        out_specs=pl.BlockSpec((tm, N_pad), lambda i, h: (i, 0)),
        scratch_shapes=[pltpu.VMEM((tm, N_pad), jnp.float32)],
        compiler_params=pltpu.CompilerParams(
            dimension_semantics=("parallel", "arbitrary"),
            vmem_limit_bytes=48 * 1024 * 1024,    # headroom on v7x (64 MiB VMEM)
        ),
    )(xp, w12, b12, w3p, b3p)

    out = out_pad[:M, :output_dim]
    return out.reshape(*orig_shape[:-1], output_dim)


def swiglu_reference(x2d, w1, b1, w2, b2, w3, b3):
    h1 = x2d @ w1 + b1
    gate = h1 * jax.nn.sigmoid(h1)
    h2 = x2d @ w2 + b2
    return (gate * h2) @ w3 + b3


def _make_params(key, input_dim, hidden_dim, output_dim):
    k1, k2, k3, kb1, kb2, kb3 = jax.random.split(key, 6)
    s1 = 1.0 / jnp.sqrt(input_dim)
    s3 = 1.0 / jnp.sqrt(hidden_dim)
    w1 = jax.random.uniform(k1, (input_dim, hidden_dim), minval=-s1, maxval=s1)
    w2 = jax.random.uniform(k2, (input_dim, hidden_dim), minval=-s1, maxval=s1)
    w3 = jax.random.uniform(k3, (hidden_dim, output_dim), minval=-s3, maxval=s3)
    b1 = jax.random.uniform(kb1, (1, hidden_dim), minval=-s1, maxval=s1)
    b2 = jax.random.uniform(kb2, (1, hidden_dim), minval=-s1, maxval=s1)
    b3 = jax.random.uniform(kb3, (1, output_dim), minval=-s3, maxval=s3)
    return w1, b1, w2, b2, w3, b3


if __name__ == "__main__":
    key = jax.random.PRNGKey(0)
    kx1, kp1, kx2, kp2 = jax.random.split(key, 4)

    # --- test 1: small shapes implied by the module ------------------------
    batch, seq = 2, 8
    input_dim, hidden_dim, output_dim = 32, 64, 32
    x = jax.random.normal(kx1, (batch, seq, input_dim), dtype=jnp.float32)
    params = _make_params(kp1, input_dim, hidden_dim, output_dim)

    out = swiglu_pallas(x, *params)
    jax.block_until_ready(out)
    ref = swiglu_reference(x.reshape(-1, input_dim), *params).reshape(
        batch, seq, output_dim
    )
    assert jnp.allclose(out, ref, atol=1e-4, rtol=1e-4), "mismatch vs reference (1)"

    # --- test 2: exercise M tiling, hidden tiling, K/N padding -------------
    batch2, seq2 = 3, 8
    in2, hid2, out2d = 48, 96, 40
    x2 = jax.random.normal(kx2, (batch2, seq2, in2), dtype=jnp.float32)
    params2 = _make_params(kp2, in2, hid2, out2d)

    out2 = swiglu_pallas(x2, *params2, tm=16, th=64)
    jax.block_until_ready(out2)
    ref2 = swiglu_reference(x2.reshape(-1, in2), *params2).reshape(
        batch2, seq2, out2d
    )
    assert jnp.allclose(out2, ref2, atol=1e-4, rtol=1e-4), "mismatch vs reference (2)"

    print("KERNEL_OK")
</pallas_src>

<mosaic_0001>
module attributes {stable_mosaic.version = 11 : i64} {
  func.func @swiglu_kernel(%arg0: i32, %arg1: i32, %arg2: memref<16x128xf32, #tpu.memory_space<vmem>>, %arg3: memref<128x128xf32, #tpu.memory_space<vmem>>, %arg4: memref<1x128xf32, #tpu.memory_space<vmem>>, %arg5: memref<64x128xf32, #tpu.memory_space<vmem>>, %arg6: memref<1x128xf32, #tpu.memory_space<vmem>>, %arg7: memref<16x128xf32, #tpu.memory_space<vmem>>, %arg8: memref<16x128xf32, #tpu.memory_space<vmem>>) attributes {dimension_semantics = [#tpu.dimension_semantics<parallel>, #tpu.dimension_semantics<arbitrary>], iteration_bounds = array<i64: 1, 1>, scalar_prefetch = 0 : i64, scratch_operands = 1 : i64, tpu.core_type = #tpu.core_type<tc>, window_params = [{transform_indices = @transform_0, window_bounds = array<i64: 16, 128>}, {transform_indices = @transform_1, window_bounds = array<i64: 128, 128>}, {transform_indices = @transform_2, window_bounds = array<i64: 1, 128>}, {transform_indices = @transform_3, window_bounds = array<i64: 64, 128>}, {pipeline_mode = #tpu.pipeline_mode<synchronous>, transform_indices = @transform_4, window_bounds = array<i64: 1, 128>}, {transform_indices = @transform_5, window_bounds = array<i64: 16, 128>}]} {
    %c0_i32 = arith.constant 0 : i32
    %0 = arith.cmpi eq, %arg1, %c0_i32 : i32
    %1 = arith.extui %0 : i1 to i32
    %c0_i32_0 = arith.constant 0 : i32
    %2 = arith.cmpi ne, %1, %c0_i32_0 : i32
    scf.if %2 {
      %cst_16 = arith.constant 0.000000e+00 : f32
      %26 = vector.broadcast %cst_16 : f32 to vector<16x128xf32>
      %c0_17 = arith.constant 0 : index
      %c0_18 = arith.constant 0 : index
      %27 = vector.load %arg8[%c0_17, %c0_18] : memref<16x128xf32, #tpu.memory_space<vmem>>, vector<16x128xf32>
      tpu.vector_store %arg8[%c0_17, %c0_18], %26 {strides = array<i32>} : memref<16x128xf32, #tpu.memory_space<vmem>>, vector<16x128xf32>,
    } else {
    }
    %c0 = arith.constant 0 : index
    %c0_1 = arith.constant 0 : index
    %3 = vector.load %arg2[%c0, %c0_1] : memref<16x128xf32, #tpu.memory_space<vmem>>, vector<16x128xf32>
    %c0_2 = arith.constant 0 : index
    %c0_3 = arith.constant 0 : index
    %4 = vector.load %arg3[%c0_2, %c0_3] : memref<128x128xf32, #tpu.memory_space<vmem>>, vector<128x128xf32>
    %cst = arith.constant dense<0.000000e+00> : vector<16x128xf32>
    %5 = tpu.matmul %3, %4, %cst {dimension_numbers = #tpu.dot_dimension_numbers<[1], [0], [0], [1], [0, 0, 1, 1], [], []>} : vector<16x128xf32>, vector<128x128xf32>, vector<16x128xf32> -> vector<16x128xf32>
    %c0_4 = arith.constant 0 : index
    %c0_5 = arith.constant 0 : index
    %6 = vector.load %arg4[%c0_4, %c0_5] : memref<1x128xf32, #tpu.memory_space<vmem>>, vector<1x128xf32>
    %7 = vector.broadcast %6 : vector<1x128xf32> to vector<16x128xf32>
    %8 = arith.addf %5, %7 : vector<16x128xf32>
    %9 = vector.extract_strided_slice %8 {offsets = [0, 0], sizes = [16, 64], strides = [1, 1]} : vector<16x128xf32> to vector<16x64xf32>
    %10 = vector.extract_strided_slice %8 {offsets = [0, 64], sizes = [16, 64], strides = [1, 1]} : vector<16x128xf32> to vector<16x64xf32>
    %11 = arith.negf %9 : vector<16x64xf32>
    %12 = math.exp %11 : vector<16x64xf32>
    %cst_6 = arith.constant 1.000000e+00 : f32
    %13 = vector.broadcast %cst_6 : f32 to vector<16x64xf32>
    %14 = arith.addf %13, %12 : vector<16x64xf32>
    %15 = arith.divf %13, %14 : vector<16x64xf32>
    %16 = arith.mulf %9, %15 : vector<16x64xf32>
    %17 = arith.mulf %16, %10 : vector<16x64xf32>
    %c0_7 = arith.constant 0 : index
    %c0_8 = arith.constant 0 : index
    %18 = vector.load %arg8[%c0_7, %c0_8] : memref<16x128xf32, #tpu.memory_space<vmem>>, vector<16x128xf32>
    %c0_9 = arith.constant 0 : index
    %c0_10 = arith.constant 0 : index
    %19 = vector.load %arg5[%c0_9, %c0_10] : memref<64x128xf32, #tpu.memory_space<vmem>>, vector<64x128xf32>
    %cst_11 = arith.constant dense<0.000000e+00> : vector<16x128xf32>
    %20 = tpu.matmul %17, %19, %cst_11 {dimension_numbers = #tpu.dot_dimension_numbers<[1], [0], [0], [1], [0, 0, 1, 1], [], []>} : vector<16x64xf32>, vector<64x128xf32>, vector<16x128xf32> -> vector<16x128xf32>
    %21 = arith.addf %18, %20 : vector<16x128xf32>
    %c0_12 = arith.constant 0 : index
    %c0_13 = arith.constant 0 : index
    %22 = vector.load %arg8[%c0_12, %c0_13] : memref<16x128xf32, #tpu.memory_space<vmem>>, vector<16x128xf32>
    tpu.vector_store %arg8[%c0_12, %c0_13], %21 {strides = array<i32>} : memref<16x128xf32, #tpu.memory_space<vmem>>, vector<16x128xf32>,
    %c0_i32_14 = arith.constant 0 : i32
    %23 = arith.cmpi eq, %arg1, %c0_i32_14 : i32
    %24 = arith.extui %23 : i1 to i32
    %c0_i32_15 = arith.constant 0 : i32
    %25 = arith.cmpi ne, %24, %c0_i32_15 : i32
    scf.if %25 {
      %c0_16 = arith.constant 0 : index
      %c0_17 = arith.constant 0 : index
      %26 = vector.load %arg8[%c0_16, %c0_17] : memref<16x128xf32, #tpu.memory_space<vmem>>, vector<16x128xf32>
      %c0_18 = arith.constant 0 : index
      %c0_19 = arith.constant 0 : index
      %27 = vector.load %arg6[%c0_18, %c0_19] : memref<1x128xf32, #tpu.memory_space<vmem>>, vector<1x128xf32>
      %28 = vector.broadcast %27 : vector<1x128xf32> to vector<16x128xf32>
      %29 = arith.addf %26, %28 : vector<16x128xf32>
      %c0_20 = arith.constant 0 : index
      %c0_21 = arith.constant 0 : index
      %30 = vector.load %arg7[%c0_20, %c0_21] : memref<16x128xf32, #tpu.memory_space<vmem>>, vector<16x128xf32>
      tpu.vector_store %arg7[%c0_20, %c0_21], %29 {strides = array<i32>} : memref<16x128xf32, #tpu.memory_space<vmem>>, vector<16x128xf32>,
    } else {
    }
    return
  }
  func.func @transform_0(%arg0: i32, %arg1: i32) -> (i32, i32) {
    %c0_i32 = arith.constant 0 : i32
    %c0_i32_0 = arith.constant 0 : i32
    return %arg0, %c0_i32 : i32, i32
  }
  func.func @transform_1(%arg0: i32, %arg1: i32) -> (i32, i32) {
    %c0_i32 = arith.constant 0 : i32
    %c0_i32_0 = arith.constant 0 : i32
    return %c0_i32, %arg1 : i32, i32
  }
  func.func @transform_2(%arg0: i32, %arg1: i32) -> (i32, i32) {
    %c0_i32 = arith.constant 0 : i32
    %c0_i32_0 = arith.constant 0 : i32
    return %c0_i32, %arg1 : i32, i32
  }
  func.func @transform_3(%arg0: i32, %arg1: i32) -> (i32, i32) {
    %c0_i32 = arith.constant 0 : i32
    %c0_i32_0 = arith.constant 0 : i32
    return %arg1, %c0_i32 : i32, i32
  }
  func.func @transform_4(%arg0: i32, %arg1: i32) -> (i32, i32) {
    %c0_i32 = arith.constant 0 : i32
    %c0_i32_0 = arith.constant 0 : i32
    %c0_i32_1 = arith.constant 0 : i32
    return %c0_i32, %c0_i32_0 : i32, i32
  }
  func.func @transform_5(%arg0: i32, %arg1: i32) -> (i32, i32) {
    %c0_i32 = arith.constant 0 : i32
    %c0_i32_0 = arith.constant 0 : i32
    return %arg0, %c0_i32 : i32, i32
  }
}

</mosaic_0001>

<llo_original>
// kernel: tpu_custom_call.1
$region0: #{tpu_custom_call.1}
  #allocation0 [shape = 'u32[]', space=smem, size = 0x4, offset = 0x4, fixed_abs, tag = 'smem constant byte address 0x4 - core index']
  #allocation1 [shape = 'u32[144,128]{1,0:T(1,128)}', space=vmem, size = 0x12000, scoped, tag = 'internal scratch']
  #allocation2 [shape = 'f32[16,128]{1,0:T(8,128)}', space=vmem, size = 0x2000, scoped, tag = 'scratch operand']
  %s0 = inlined_call_operand.hbm [shape: f32[16,128], index: 0, kind: input, shape index: {}]
  %s1 = inlined_call_operand.hbm [shape: f32[128,128], index: 1, kind: input, shape index: {}]
  %s2 = inlined_call_operand.vmem [shape: f32[1,128], index: 2, kind: input, shape index: {}]
  %s3 = inlined_call_operand.hbm [shape: f32[64,128], index: 3, kind: input, shape index: {}]
  %s4 = inlined_call_operand.vmem [shape: f32[1,128], index: 4, kind: input, shape index: {}]
  %s5 = inlined_call_operand.hbm [shape: f32[16,128], index: 5, kind: output, shape index: {}]
  %s6 = sld [smem:[#allocation0]]
  $region50: #{tpu_custom_call.1} parent=0
    _
  %s8 = ssub.s32 1, %s6
  %s9 = scalar_select 0, %s8, %s6
  $region1: #{tpu_custom_call.1} parent=0
    #allocation3 [shape = 'u8[8192]{0}', space=vmem, size = 0x2000, scoped, tag = 'input window, operand 0, single buffered']
    #allocation4 [shape = 's32[1]{0}', space=sflag, size = 0x4, scoped, tag = 'scoped memory for tpu_custom_call.1']
    #allocation5 [shape = 's32[1]{0}', space=sflag, size = 0x4, scoped, tag = 'scoped memory for tpu_custom_call.1']
    #allocation6 [shape = 'u8[65536]{0}', space=vmem, size = 0x10000, scoped, tag = 'input window, operand 1, single buffered']
    #allocation7 [shape = 's32[1]{0}', space=sflag, size = 0x4, scoped, tag = 'scoped memory for tpu_custom_call.1']
    #allocation8 [shape = 'u8[32768]{0}', space=vmem, size = 0x8000, scoped, tag = 'input window, operand 3, single buffered']
    #allocation9 [shape = 'u8[8192]{0}', space=vmem, size = 0x2000, scoped, tag = 'output window, operand 0, single buffered']
    %10 = vsyncpa [#allocation4], 0
    %11 = vsyncpa [#allocation7], 0
    %12 = vsyncpa [#allocation5], 0
    // Predicated region
    $region2: #{tpu_custom_call.1} parent=1 // pred_check
      _
    $region3: #{tpu_custom_call.1} parent=1 // pred_check_branch
      %14 = sbr.rel (0) target = $region5
    $region4: #{tpu_custom_call.1} parent=1 // pred_region
      %s16 = ssub.s32 256, 256
      %17 = vsyncadd [#allocation4], %s16
      %s18 = sshll.u32 [#allocation3], 4
      %s19 = int_to_ptr.vmem [resolvable:$true] %s18
      %24 = dma.hbm_to_vmem [thread:$0]  %s0, 256, %s19, [#allocation4], 128, 128, 8
    $region5: #{tpu_custom_call.1} parent=1 // pred_fallthru
      _
    // Predicated region
    $region6: #{tpu_custom_call.1} parent=1 // pred_check
      _
    $region7: #{tpu_custom_call.1} parent=1 // pred_check_branch
      %26 = sbr.rel (0) target = $region9
    $region8: #{tpu_custom_call.1} parent=1 // pred_region
      %s28 = ssub.s32 2048, 2048
      %29 = vsyncadd [#allocation7], %s28
      %s30 = sshll.u32 [#allocation6], 4
      %s31 = int_to_ptr.vmem [resolvable:$true] %s30
      %36 = dma.hbm_to_vmem [thread:$0]  %s1, 2048, %s31, [#allocation7], 128, 128, 8
    $region9: #{tpu_custom_call.1} parent=1 // pred_fallthru
      _
    // Predicated region
    $region10: #{tpu_custom_call.1} parent=1 // pred_check
      _
    $region11: #{tpu_custom_call.1} parent=1 // pred_check_branch
      %38 = sbr.rel (0) target = $region13
    $region12: #{tpu_custom_call.1} parent=1 // pred_region
      _
    $region13: #{tpu_custom_call.1} parent=1 // pred_fallthru
      _
    // Predicated region
    $region14: #{tpu_custom_call.1} parent=1 // pred_check
      _
    $region15: #{tpu_custom_call.1} parent=1 // pred_check_branch
      %40 = sbr.rel (0) target = $region17
    $region16: #{tpu_custom_call.1} parent=1 // pred_region
      %s42 = ssub.s32 1024, 1024
      %43 = vsyncadd [#allocation7], %s42
      %s44 = sshll.u32 [#allocation8], 4
      %s45 = int_to_ptr.vmem [resolvable:$true] %s44
      %50 = dma.hbm_to_vmem [thread:$0]  %s3, 1024, %s45, [#allocation7], 128, 128, 8
    $region17: #{tpu_custom_call.1} parent=1 // pred_fallthru
      _
    // Predicated region
    $region18: #{tpu_custom_call.1} parent=1 // pred_check
      _
    $region19: #{tpu_custom_call.1} parent=1 // pred_check_branch
      %52 = sbr.rel (0) target = $region21
    $region20: #{tpu_custom_call.1} parent=1 // pred_region
      _
    $region21: #{tpu_custom_call.1} parent=1 // pred_fallthru
      _
    // Predicated region
    $region22: #{tpu_custom_call.1} parent=1 // pred_check
      _
    $region23: #{tpu_custom_call.1} parent=1 // pred_check_branch
      %54 = sbr.rel (0) target = $region25
    $region24: #{tpu_custom_call.1} parent=1 // pred_region
      %55 = dma.done [#allocation4], 256
    $region25: #{tpu_custom_call.1} parent=1 // pred_fallthru
      _
    // Predicated region
    $region26: #{tpu_custom_call.1} parent=1 // pred_check
      _
    $region27: #{tpu_custom_call.1} parent=1 // pred_check_branch
      %57 = sbr.rel (0) target = $region29
    $region28: #{tpu_custom_call.1} parent=1 // pred_region
      %58 = dma.done [#allocation7], 2048
    $region29: #{tpu_custom_call.1} parent=1 // pred_fallthru
      _
    // Predicated region
    $region30: #{tpu_custom_call.1} parent=1 // pred_check
      _
    $region31: #{tpu_custom_call.1} parent=1 // pred_check_branch
      %60 = sbr.rel (0) target = $region33
    $region32: #{tpu_custom_call.1} parent=1 // pred_region
      %61 = dma.done [#allocation7], 1024
    $region33: #{tpu_custom_call.1} parent=1 // pred_fallthru
      _
    %p62 = scmp.eq.s32.totalorder 0, 0
    // Predicated region
    $region34: #{tpu_custom_call.1} parent=1 // pred_check
      %p63 = pneg %p62
    $region35: #{tpu_custom_call.1} parent=1 // pred_check_branch
      %65 = sbr.rel (%p63) target = $region37
    $region36: #{tpu_custom_call.1} parent=1 // pred_region
      %66 = vst [vmem:[#allocation2] sm:$0xff] 0.0
      %67 = vst [vmem:[#allocation2 + $0x8] sm:$0xff] 0.0
    $region37: #{tpu_custom_call.1} parent=1 // pred_fallthru
      _
    %v68 = vld [vmem:[#allocation3] sm:$0xff]
    %v69 = vld [vmem:[#allocation3 + $0x8] sm:$0xff]
    %v70 = vld [vmem:[#allocation6] sm:$0xff]
    %v71 = vld [vmem:[#allocation6 + $0x8] sm:$0xff]
    %v72 = vld [vmem:[#allocation6 + $0x10] sm:$0xff]
    %v73 = vld [vmem:[#allocation6 + $0x18] sm:$0xff]
    %v74 = vld [vmem:[#allocation6 + $0x20] sm:$0xff]
    %v75 = vld [vmem:[#allocation6 + $0x28] sm:$0xff]
    %v76 = vld [vmem:[#allocation6 + $0x30] sm:$0xff]
    %v77 = vld [vmem:[#allocation6 + $0x38] sm:$0xff]
    %v78 = vld [vmem:[#allocation6 + $0x40] sm:$0xff]
    %v79 = vld [vmem:[#allocation6 + $0x48] sm:$0xff]
    %v80 = vld [vmem:[#allocation6 + $0x50] sm:$0xff]
    %v81 = vld [vmem:[#allocation6 + $0x58] sm:$0xff]
    %v82 = vld [vmem:[#allocation6 + $0x60] sm:$0xff]
    %v83 = vld [vmem:[#allocation6 + $0x68] sm:$0xff]
    %v84 = vld [vmem:[#allocation6 + $0x70] sm:$0xff]
    %v85 = vld [vmem:[#allocation6 + $0x78] sm:$0xff]
    %v86 = vld [vmem:[%s2] sm:$0x1]
    %v88 = vlaneseq
    %v89 = vshrl.u32 %v88, 7
    %v90 = vsub.s32 0, %v89
    %v91 = vrot.slane %v86, %v90
    %93 = vmatprep.subr.mxu0 0.0
    %94 = vmatpush1.msra.mxu0 %v70
    %95 = vmatprep.subr.mxu0 0.0
    %96 = vmatpush1.msra.mxu0 %v71
    %97 = vmatprep.subr.mxu0 0.0
    %98 = vmatpush1.msra.mxu0 %v72
    %99 = vmatprep.subr.mxu0 0.0
    %100 = vmatpush1.msra.mxu0 %v73
    %101 = vmatprep.subr.mxu0 0.0
    %102 = vmatpush1.msra.mxu0 %v74
    %103 = vmatprep.subr.mxu0 0.0
    %104 = vmatpush1.msra.mxu0 %v75
    %105 = vmatprep.subr.mxu0 0.0
    %106 = vmatpush1.msra.mxu0 %v76
    %107 = vmatprep.subr.mxu0 0.0
    %108 = vmatpush1.msra.mxu0 %v77
    %109 = vmatprep.subr.mxu0 0.0
    %110 = vmatpush1.msra.mxu0 %v78
    %111 = vmatprep.subr.mxu0 0.0
    %112 = vmatpush1.msra.mxu0 %v79
    %113 = vmatprep.subr.mxu0 0.0
    %114 = vmatpush1.msra.mxu0 %v80
    %115 = vmatprep.subr.mxu0 0.0
    %116 = vmatpush1.msra.mxu0 %v81
    %117 = vmatprep.subr.mxu0 0.0
    %118 = vmatpush1.msra.mxu0 %v82
    %119 = vmatprep.subr.mxu0 0.0
    %120 = vmatpush1.msra.mxu0 %v83
    %121 = vmatprep.subr.mxu0 0.0
    %122 = vmatpush1.msra.mxu0 %v84
    %123 = vmatprep.subr.mxu0 0.0
    %124 = vmatpush1.msra.mxu0 %v85
    %125 = vmatprep.subr.mxu0 0.0
    %126 = vmatpush1.msra.mxu0 0.0
    %127 = vmatprep.subr.mxu0 0.0
    %128 = vmatpush1.msra.mxu0 0.0
    %129 = vmatprep.subr.mxu0 0.0
    %130 = vmatpush1.msra.mxu0 0.0
    %131 = vmatprep.subr.mxu0 0.0
    %132 = vmatpush1.msra.mxu0 0.0
    %133 = vmatprep.subr.mxu0 0.0
    %134 = vmatpush1.msra.mxu0 0.0
    %135 = vmatprep.subr.mxu0 0.0
    %136 = vmatpush1.msra.mxu0 0.0
    %137 = vmatprep.subr.mxu0 0.0
    %138 = vmatpush1.msra.mxu0 0.0
    %139 = vmatprep.subr.mxu0 0.0
    %140 = vmatpush1.msra.mxu0 0.0
    %141 = vmatprep.subr.mxu0 0.0
    %142 = vmatpush1.msra.mxu0 0.0
    %143 = vmatprep.subr.mxu0 0.0
    %144 = vmatpush1.msra.mxu0 0.0
    %145 = vmatprep.subr.mxu0 0.0
    %146 = vmatpush1.msra.mxu0 0.0
    %147 = vmatprep.subr.mxu0 0.0
    %148 = vmatpush1.msra.mxu0 0.0
    %149 = vmatprep.subr.mxu0 0.0
    %150 = vmatpush1.msra.mxu0 0.0
    %151 = vmatprep.subr.mxu0 0.0
    %152 = vmatpush1.msra.mxu0 0.0
    %153 = vmatprep.subr.mxu0 0.0
    %154 = vmatpush1.msra.mxu0 0.0
    %155 = vmatprep.subr.mxu0 0.0
    %156 = vmatpush1.msra.mxu0 0.0
    %157 = vmatprep.mubr.f32.mxu0 0.0
    %158 = vmatmul.mubr.f32.gmra.mrb[0].mxu0 %v68
    %v159 = vpop.f32.mrb[0].mxu0
    %v160 = vadd.f32 %v91, %v159
    %v161 = vpop.f32.mrb[0].mxu0
    %162 = vmatprep.mubr.f32.mxu0 0.0
    %163 = vmatmul.mubr.f32.gmra.mrb[0].mxu0 %v69
    %v164 = vpop.f32.mrb[0].mxu0
    %v165 = vadd.f32 %v91, %v164
    %v166 = vpop.f32.mrb[0].mxu0
    %167 = vdwg.mxu0
    %v168 = vxor.u32 %v160, 2147483648
    %v169 = vxor.u32 %v165, 2147483648
    %v170 = vmul.f32 %v168, 1.442695
    %v171 = vpow.pop %v170
    %v172 = vmul.f32 %v169, 1.442695
    %v173 = vpow.pop %v172
    %v174 = vadd.f32 %v171, 1.0
    %v175 = vadd.f32 %v173, 1.0
    %v176 = vrcp.pop %v174
    %v177 = vmul.f32 1.0, %v176
    %v178 = vrcp.pop %v175
    %v179 = vmul.f32 1.0, %v178
    %v180 = vmul.f32 %v160, %v177
    %v181 = vmul.f32 %v165, %v179
    %184 = vrot.lane.b32.xlu0 %v160, 64
    %v185 = vpop.permute.xlu0 %184
    %186 = vrot.lane.b32.xlu0 %v165, 64
    %v187 = vpop.permute.xlu0 %186
    %v190 = vmul.f32 %v180, %v185
    %v191 = vmul.f32 %v181, %v187
    %v192 = vld [vmem:[#allocation2] sm:$0xff]
    %v193 = vld [vmem:[#allocation2 + $0x8] sm:$0xff]
    %v194 = vld [vmem:[#allocation8] sm:$0xff]
    %v195 = vld [vmem:[#allocation8 + $0x8] sm:$0xff]
    %v196 = vld [vmem:[#allocation8 + $0x10] sm:$0xff]
    %v197 = vld [vmem:[#allocation8 + $0x18] sm:$0xff]
    %v198 = vld [vmem:[#allocation8 + $0x20] sm:$0xff]
    %v199 = vld [vmem:[#allocation8 + $0x28] sm:$0xff]
    %v200 = vld [vmem:[#allocation8 + $0x30] sm:$0xff]
    %v201 = vld [vmem:[#allocation8 + $0x38] sm:$0xff]
    %vm202 = vcmask 523264
    %v204 = vsel %vm202, %v190, 0
    %v207 = vsel %vm202, %v191, 0
    %209 = vmatprep.subr.mxu0 0.0
    %210 = vmatpush1.msra.mxu0 %v194
    %211 = vmatprep.subr.mxu0 0.0
    %212 = vmatpush1.msra.mxu0 %v195
    %213 = vmatprep.subr.mxu0 0.0
    %214 = vmatpush1.msra.mxu0 %v196
    %215 = vmatprep.subr.mxu0 0.0
    %216 = vmatpush1.msra.mxu0 %v197
    %217 = vmatprep.subr.mxu0 0.0
    %218 = vmatpush1.msra.mxu0 %v198
    %219 = vmatprep.subr.mxu0 0.0
    %220 = vmatpush1.msra.mxu0 %v199
    %221 = vmatprep.subr.mxu0 0.0
    %222 = vmatpush1.msra.mxu0 %v200
    %223 = vmatprep.subr.mxu0 0.0
    %224 = vmatpush1.msra.mxu0 %v201
    %225 = vmatprep.subr.mxu0 0.0
    %226 = vmatpush1.msra.mxu0 0.0
    %227 = vmatprep.subr.mxu0 0.0
    %228 = vmatpush1.msra.mxu0 0.0
    %229 = vmatprep.subr.mxu0 0.0
    %230 = vmatpush1.msra.mxu0 0.0
    %231 = vmatprep.subr.mxu0 0.0
    %232 = vmatpush1.msra.mxu0 0.0
    %233 = vmatprep.subr.mxu0 0.0
    %234 = vmatpush1.msra.mxu0 0.0
    %235 = vmatprep.subr.mxu0 0.0
    %236 = vmatpush1.msra.mxu0 0.0
    %237 = vmatprep.subr.mxu0 0.0
    %238 = vmatpush1.msra.mxu0 0.0
    %239 = vmatprep.subr.mxu0 0.0
    %240 = vmatpush1.msra.mxu0 0.0
    %241 = vmatprep.subr.mxu0 0.0
    %242 = vmatpush1.msra.mxu0 0.0
    %243 = vmatprep.subr.mxu0 0.0
    %244 = vmatpush1.msra.mxu0 0.0
    %245 = vmatprep.subr.mxu0 0.0
    %246 = vmatpush1.msra.mxu0 0.0
    %247 = vmatprep.subr.mxu0 0.0
    %248 = vmatpush1.msra.mxu0 0.0
    %249 = vmatprep.subr.mxu0 0.0
    %250 = vmatpush1.msra.mxu0 0.0
    %251 = vmatprep.subr.mxu0 0.0
    %252 = vmatpush1.msra.mxu0 0.0
    %253 = vmatprep.subr.mxu0 0.0
    %254 = vmatpush1.msra.mxu0 0.0
    %255 = vmatprep.subr.mxu0 0.0
    %256 = vmatpush1.msra.mxu0 0.0
    %257 = vmatprep.subr.mxu0 0.0
    %258 = vmatpush1.msra.mxu0 0.0
    %259 = vmatprep.subr.mxu0 0.0
    %260 = vmatpush1.msra.mxu0 0.0
    %261 = vmatprep.subr.mxu0 0.0
    %262 = vmatpush1.msra.mxu0 0.0
    %263 = vmatprep.subr.mxu0 0.0
    %264 = vmatpush1.msra.mxu0 0.0
    %265 = vmatprep.subr.mxu0 0.0
    %266 = vmatpush1.msra.mxu0 0.0
    %267 = vmatprep.subr.mxu0 0.0
    %268 = vmatpush1.msra.mxu0 0.0
    %269 = vmatprep.subr.mxu0 0.0
    %270 = vmatpush1.msra.mxu0 0.0
    %271 = vmatprep.subr.mxu0 0.0
    %272 = vmatpush1.msra.mxu0 0.0
    %273 = vmatprep.mubr.f32.mxu0 0.0
    %274 = vmatmul.mubr.f32.gmra.mrb[0].mxu0 %v204
    %v275 = vpop.f32.mrb[0].mxu0
    %v276 = vadd.f32 0.0, %v275
    %v277 = vpop.f32.mrb[0].mxu0
    %278 = vmatprep.mubr.f32.mxu0 0.0
    %279 = vmatmul.mubr.f32.gmra.mrb[0].mxu0 %v207
    %v280 = vpop.f32.mrb[0].mxu0
    %v281 = vadd.f32 0.0, %v280
    %v282 = vpop.f32.mrb[0].mxu0
    %283 = vdwg.mxu0
    %v284 = vadd.f32 %v192, %v276
    %v285 = vadd.f32 %v193, %v281
    %286 = vst [vmem:[#allocation2] sm:$0xff] %v284
    %287 = vst [vmem:[#allocation2 + $0x8] sm:$0xff] %v285
    // Predicated region
    $region38: #{tpu_custom_call.1} parent=1 // pred_check
      %p288 = pneg %p62
    $region39: #{tpu_custom_call.1} parent=1 // pred_check_branch
      %290 = sbr.rel (%p288) target = $region41
    $region40: #{tpu_custom_call.1} parent=1 // pred_region
      %v291 = vld [vmem:[#allocation2] sm:$0xff]
      %v292 = vld [vmem:[#allocation2 + $0x8] sm:$0xff]
      %v293 = vld [vmem:[%s4] sm:$0x1]
      %v295 = vlaneseq
      %v296 = vshrl.u32 %v295, 7
      %v297 = vsub.s32 0, %v296
      %v298 = vrot.slane %v293, %v297
      %v300 = vadd.f32 %v291, %v298
      %v301 = vadd.f32 %v292, %v298
      %302 = vst [vmem:[#allocation9] sm:$0xff] %v300
      %303 = vst [vmem:[#allocation9 + $0x8] sm:$0xff] %v301
    $region41: #{tpu_custom_call.1} parent=1 // pred_fallthru
      _
    // Predicated region
    $region42: #{tpu_custom_call.1} parent=1 // pred_check
      _
    $region43: #{tpu_custom_call.1} parent=1 // pred_check_branch
      %305 = sbr.rel (0) target = $region45
    $region44: #{tpu_custom_call.1} parent=1 // pred_region
      %s307 = ssub.s32 256, 256
      %308 = vsyncadd [#allocation5], %s307
      %s309 = sshll.u32 [#allocation9], 4
      %s310 = int_to_ptr.vmem [resolvable:$true] %s309
      %315 = dma.vmem_to_hbm [thread:$0]  %s310, 256, %s5, [#allocation5], 128, 128, 8
    $region45: #{tpu_custom_call.1} parent=1 // pred_fallthru
      _
    // Predicated region
    $region46: #{tpu_custom_call.1} parent=1 // pred_check
      _
    $region47: #{tpu_custom_call.1} parent=1 // pred_check_branch
      %317 = sbr.rel (0) target = $region49
    $region48: #{tpu_custom_call.1} parent=1 // pred_region
      %318 = dma.done [#allocation5], 256
    $region49: #{tpu_custom_call.1} parent=1 // pred_fallthru
      _
    %319 = vsyncpa [#allocation4], 1
    %320 = vsyncpa [#allocation7], 1
    %321 = vsyncpa [#allocation5], 1

</llo_original>
